<compile_context>
chip_gen: v7x
topology: tpu7x:2x2x1
jax: 0.10.0
libtpu: 0.0.40
codegen_flags: <defaults>
</compile_context>

<pallas_src>
import functools

import numpy as np
import jax
import jax.numpy as jnp
from jax.experimental import pallas as pl
from jax.experimental.pallas import tpu as pltpu


def _irfft2_sep_kernel(x_ref, w2r_ref, w2i_ref, ch_ref, sh_ref, out_ref):
    """Separable irfft2 as a few small MXU matmuls, fully inside VMEM.

    x_ref   : (C*H, 2K) f32  row (c, m) = [Re(S)[c, m, :] | Im(S)[c, m, :]]
    w2r_ref : (2K, W)   f32  W-stage weights -> Re of the row-wise Hermitian irfft
    w2i_ref : (2K, W)   f32  W-stage weights -> Im of the row-wise Hermitian irfft
    ch_ref  : (H, H)    f32  cos(2*pi*h*m/H) / H
    sh_ref  : (H, H)    f32  sin(2*pi*h*m/H) / H
    out_ref : (C, H, W) f32
    """
    C, H, W = out_ref.shape
    x = x_ref[...]
    # Stage B: W-axis Hermitian irfft, channel-batched (M = C*H rows).
    r = jnp.dot(x, w2r_ref[...], preferred_element_type=jnp.float32)   # (C*H, W)
    im = jnp.dot(x, w2i_ref[...], preferred_element_type=jnp.float32)  # (C*H, W)
    ch = ch_ref[...]
    sh = sh_ref[...]
    # Stage A: H-axis complex iDFT, weight on the left, per channel
    # (C is a tiny static Python unroll; row slices are 8-aligned).
    for c in range(C):
        rc = r[c * H:(c + 1) * H]     # (H, W)
        ic = im[c * H:(c + 1) * H]    # (H, W)
        out_ref[c] = (jnp.dot(ch, rc, preferred_element_type=jnp.float32)
                      - jnp.dot(sh, ic, preferred_element_type=jnp.float32))


def _build_sep_irfft2_weights(H, W):
    """Separable irfft2 constant matrices (built in f64, cast to f32).

    Returns:
      w2r (2K, W): [ wgt*cos(2*pi*w*k/W)/W ; -wgt*sin(...)/W ]
      w2i (2K, W): [ wgt*sin(2*pi*w*k/W)/W ;  wgt*cos(...)/W ]
      ch  (H, H):  cos(2*pi*h*m/H)/H
      sh  (H, H):  sin(2*pi*h*m/H)/H
    with wgt doubling all bins except DC (and Nyquist when W is even), so
    that the composition matches torch.fft.irfft2 ("backward" norm).
    """
    K = W // 2 + 1
    h = np.arange(H, dtype=np.float64)
    m = np.arange(H, dtype=np.float64)
    k = np.arange(K, dtype=np.float64)
    w = np.arange(W, dtype=np.float64)

    ang_h = 2.0 * np.pi * np.outer(h, m) / H                 # (H, H)
    ch = (np.cos(ang_h) / H).astype(np.float32)
    sh = (np.sin(ang_h) / H).astype(np.float32)

    wgt = np.full((K,), 2.0, dtype=np.float64)
    wgt[0] = 1.0
    if W % 2 == 0:
        wgt[-1] = 1.0                                        # Nyquist not doubled
    ang_w = 2.0 * np.pi * np.outer(k, w) / W                 # (K, W)
    cw = wgt[:, None] * np.cos(ang_w) / W
    sw = wgt[:, None] * np.sin(ang_w) / W
    w2r = np.concatenate([cw, -sw], axis=0).astype(np.float32)   # (2K, W)
    w2i = np.concatenate([sw, cw], axis=0).astype(np.float32)    # (2K, W)
    return w2r, w2i, ch, sh


@jax.jit
def _irfft2_forward(spectrum, w2r, w2i, ch, sh):
    """spectrum: (1, C, H, K) complex. Returns (1, C, H, W) f32 = irfft2(spectrum)."""
    _, C, H, K = spectrum.shape
    W = w2r.shape[1]
    HW_flops = (2 * 2 * (C * H) * (2 * K) * W       # two stage-B dots
                + C * 2 * 2 * H * H * W)            # per-channel stage-A dots
    bytes_accessed = 4 * (C * H * 2 * K + 2 * (2 * K * W) + 2 * H * H + C * H * W)

    # Recomputed every call so parameter updates to `spectrum` are reflected.
    sr = jnp.real(spectrum)[0].astype(jnp.float32)            # (C, H, K)
    si = jnp.imag(spectrum)[0].astype(jnp.float32)            # (C, H, K)
    x = jnp.concatenate([sr, si], axis=-1).reshape(C * H, 2 * K)  # (C*H, 2K)

    vmem = pl.BlockSpec(memory_space=pltpu.MemorySpace.VMEM)
    out = pl.pallas_call(
        _irfft2_sep_kernel,
        out_shape=jax.ShapeDtypeStruct((C, H, W), jnp.float32),
        in_specs=[vmem, vmem, vmem, vmem, vmem],
        out_specs=vmem,
        cost_estimate=pl.CostEstimate(
            flops=HW_flops,
            transcendentals=0,
            bytes_accessed=bytes_accessed),
    )(x, w2r, w2i, ch, sh)
    return out[None]                                           # (1, C, H, W)


class ExistingFourierImagePallas:
    """JAX/Pallas port of ExistingFourierImage.

    Instead of loading an image file, a deterministic synthetic image is used
    and its rfft2 spectrum is stored as the 'parameter'. forward() runs the
    inverse real 2-D FFT as one separable-matmul Pallas kernel.
    """

    def __init__(self, key, H=16, W=16, C=3):
        # synthetic "image" in [0, 1], shape (H, W, C), like np.array(im)/255
        img_hwc = jax.random.uniform(key, (H, W, C), dtype=jnp.float32)
        # unsqueeze(0) + permute(0, 3, 1, 2) -> (1, C, H, W)
        img_nchw = jnp.transpose(img_hwc[None], (0, 3, 1, 2))
        self.spectrum = jnp.fft.rfft2(img_nchw)     # (1, C, H, W//2+1) complex64
        self.H, self.W, self.C = H, W, C

        w2r, w2i, ch, sh = _build_sep_irfft2_weights(H, W)
        self._w2r = jnp.asarray(w2r)
        self._w2i = jnp.asarray(w2i)
        self._ch = jnp.asarray(ch)
        self._sh = jnp.asarray(sh)

    def forward(self):
        return _irfft2_forward(self.spectrum, self._w2r, self._w2i,
                               self._ch, self._sh)


if __name__ == "__main__":
    key = jax.random.PRNGKey(0)
    model = ExistingFourierImagePallas(key, H=16, W=16, C=3)

    img = model.forward()
    jax.block_until_ready(img)

    # Reference: jnp.fft.irfft2 of the stored spectrum (same as torch.fft.irfft2).
    ref = jnp.fft.irfft2(model.spectrum).astype(jnp.float32)
    assert img.shape == (1, 3, 16, 16), img.shape
    err = float(jnp.max(jnp.abs(img - ref)))
    assert err < 1e-4, f"max abs error too large: {err}"

    print("KERNEL_OK")
</pallas_src>

<mosaic_0001>
module attributes {stable_mosaic.version = 11 : i64} {
  func.func @_irfft2_sep_kernel(%arg0: memref<48x18xf32, #tpu.memory_space<vmem>>, %arg1: memref<18x16xf32, #tpu.memory_space<vmem>>, %arg2: memref<18x16xf32, #tpu.memory_space<vmem>>, %arg3: memref<16x16xf32, #tpu.memory_space<vmem>>, %arg4: memref<16x16xf32, #tpu.memory_space<vmem>>, %arg5: memref<3x16x16xf32, #tpu.memory_space<vmem>>) attributes {dimension_semantics = [], scalar_prefetch = 0 : i64, scratch_operands = 0 : i64, tpu.core_type = #tpu.core_type<tc>} {
    %c0 = arith.constant 0 : index
    %c0_0 = arith.constant 0 : index
    %0 = vector.load %arg0[%c0, %c0_0] : memref<48x18xf32, #tpu.memory_space<vmem>>, vector<48x18xf32>
    %c0_1 = arith.constant 0 : index
    %c0_2 = arith.constant 0 : index
    %1 = vector.load %arg1[%c0_1, %c0_2] : memref<18x16xf32, #tpu.memory_space<vmem>>, vector<18x16xf32>
    %cst = arith.constant dense<0.000000e+00> : vector<48x16xf32>
    %2 = tpu.matmul %0, %1, %cst {dimension_numbers = #tpu.dot_dimension_numbers<[1], [0], [0], [1], [0, 0, 1, 1], [], []>} : vector<48x18xf32>, vector<18x16xf32>, vector<48x16xf32> -> vector<48x16xf32>
    %c0_3 = arith.constant 0 : index
    %c0_4 = arith.constant 0 : index
    %3 = vector.load %arg2[%c0_3, %c0_4] : memref<18x16xf32, #tpu.memory_space<vmem>>, vector<18x16xf32>
    %cst_5 = arith.constant dense<0.000000e+00> : vector<48x16xf32>
    %4 = tpu.matmul %0, %3, %cst_5 {dimension_numbers = #tpu.dot_dimension_numbers<[1], [0], [0], [1], [0, 0, 1, 1], [], []>} : vector<48x18xf32>, vector<18x16xf32>, vector<48x16xf32> -> vector<48x16xf32>
    %c0_6 = arith.constant 0 : index
    %c0_7 = arith.constant 0 : index
    %5 = vector.load %arg3[%c0_6, %c0_7] : memref<16x16xf32, #tpu.memory_space<vmem>>, vector<16x16xf32>
    %c0_8 = arith.constant 0 : index
    %c0_9 = arith.constant 0 : index
    %6 = vector.load %arg4[%c0_8, %c0_9] : memref<16x16xf32, #tpu.memory_space<vmem>>, vector<16x16xf32>
    %7 = vector.extract_strided_slice %2 {offsets = [0, 0], sizes = [16, 16], strides = [1, 1]} : vector<48x16xf32> to vector<16x16xf32>
    %8 = vector.extract_strided_slice %4 {offsets = [0, 0], sizes = [16, 16], strides = [1, 1]} : vector<48x16xf32> to vector<16x16xf32>
    %cst_10 = arith.constant dense<0.000000e+00> : vector<16x16xf32>
    %9 = tpu.matmul %5, %7, %cst_10 {dimension_numbers = #tpu.dot_dimension_numbers<[1], [0], [0], [1], [0, 0, 1, 1], [], []>} : vector<16x16xf32>, vector<16x16xf32>, vector<16x16xf32> -> vector<16x16xf32>
    %cst_11 = arith.constant dense<0.000000e+00> : vector<16x16xf32>
    %10 = tpu.matmul %6, %8, %cst_11 {dimension_numbers = #tpu.dot_dimension_numbers<[1], [0], [0], [1], [0, 0, 1, 1], [], []>} : vector<16x16xf32>, vector<16x16xf32>, vector<16x16xf32> -> vector<16x16xf32>
    %11 = arith.subf %9, %10 : vector<16x16xf32>
    %c0_12 = arith.constant 0 : index
    %c0_13 = arith.constant 0 : index
    %c0_14 = arith.constant 0 : index
    %12 = vector.load %arg5[%c0_12, %c0_13, %c0_14] : memref<3x16x16xf32, #tpu.memory_space<vmem>>, vector<1x16x16xf32>
    %13 = vector.shape_cast %12 : vector<1x16x16xf32> to vector<16x16xf32>
    %14 = vector.shape_cast %11 : vector<16x16xf32> to vector<1x16x16xf32>
    tpu.vector_store %arg5[%c0_12, %c0_13, %c0_14], %14 {strides = array<i32>} : memref<3x16x16xf32, #tpu.memory_space<vmem>>, vector<1x16x16xf32>,
    %15 = vector.extract_strided_slice %2 {offsets = [16, 0], sizes = [16, 16], strides = [1, 1]} : vector<48x16xf32> to vector<16x16xf32>
    %16 = vector.extract_strided_slice %4 {offsets = [16, 0], sizes = [16, 16], strides = [1, 1]} : vector<48x16xf32> to vector<16x16xf32>
    %cst_15 = arith.constant dense<0.000000e+00> : vector<16x16xf32>
    %17 = tpu.matmul %5, %15, %cst_15 {dimension_numbers = #tpu.dot_dimension_numbers<[1], [0], [0], [1], [0, 0, 1, 1], [], []>} : vector<16x16xf32>, vector<16x16xf32>, vector<16x16xf32> -> vector<16x16xf32>
    %cst_16 = arith.constant dense<0.000000e+00> : vector<16x16xf32>
    %18 = tpu.matmul %6, %16, %cst_16 {dimension_numbers = #tpu.dot_dimension_numbers<[1], [0], [0], [1], [0, 0, 1, 1], [], []>} : vector<16x16xf32>, vector<16x16xf32>, vector<16x16xf32> -> vector<16x16xf32>
    %19 = arith.subf %17, %18 : vector<16x16xf32>
    %c1 = arith.constant 1 : index
    %c0_17 = arith.constant 0 : index
    %c0_18 = arith.constant 0 : index
    %20 = vector.load %arg5[%c1, %c0_17, %c0_18] : memref<3x16x16xf32, #tpu.memory_space<vmem>>, vector<1x16x16xf32>
    %21 = vector.shape_cast %20 : vector<1x16x16xf32> to vector<16x16xf32>
    %22 = vector.shape_cast %19 : vector<16x16xf32> to vector<1x16x16xf32>
    tpu.vector_store %arg5[%c1, %c0_17, %c0_18], %22 {strides = array<i32>} : memref<3x16x16xf32, #tpu.memory_space<vmem>>, vector<1x16x16xf32>,
    %23 = vector.extract_strided_slice %2 {offsets = [32, 0], sizes = [16, 16], strides = [1, 1]} : vector<48x16xf32> to vector<16x16xf32>
    %24 = vector.extract_strided_slice %4 {offsets = [32, 0], sizes = [16, 16], strides = [1, 1]} : vector<48x16xf32> to vector<16x16xf32>
    %cst_19 = arith.constant dense<0.000000e+00> : vector<16x16xf32>
    %25 = tpu.matmul %5, %23, %cst_19 {dimension_numbers = #tpu.dot_dimension_numbers<[1], [0], [0], [1], [0, 0, 1, 1], [], []>} : vector<16x16xf32>, vector<16x16xf32>, vector<16x16xf32> -> vector<16x16xf32>
    %cst_20 = arith.constant dense<0.000000e+00> : vector<16x16xf32>
    %26 = tpu.matmul %6, %24, %cst_20 {dimension_numbers = #tpu.dot_dimension_numbers<[1], [0], [0], [1], [0, 0, 1, 1], [], []>} : vector<16x16xf32>, vector<16x16xf32>, vector<16x16xf32> -> vector<16x16xf32>
    %27 = arith.subf %25, %26 : vector<16x16xf32>
    %c2 = arith.constant 2 : index
    %c0_21 = arith.constant 0 : index
    %c0_22 = arith.constant 0 : index
    %28 = vector.load %arg5[%c2, %c0_21, %c0_22] : memref<3x16x16xf32, #tpu.memory_space<vmem>>, vector<1x16x16xf32>
    %29 = vector.shape_cast %28 : vector<1x16x16xf32> to vector<16x16xf32>
    %30 = vector.shape_cast %27 : vector<16x16xf32> to vector<1x16x16xf32>
    tpu.vector_store %arg5[%c2, %c0_21, %c0_22], %30 {strides = array<i32>} : memref<3x16x16xf32, #tpu.memory_space<vmem>>, vector<1x16x16xf32>,
    return
  }
}

</mosaic_0001>

<llo_original>
// kernel: custom-call.1
$region0: #{custom-call.1}
  %s0 = inlined_call_operand.hbm [shape: c64[1,3,16,9], index: 0, kind: input, shape index: {}]
  %s1 = inlined_call_operand.vmem [shape: f32[1,3,16,9], index: 1, kind: output, shape index: {}]
  %s2 = scalar_lea.hbm %s0, 432
  $region1: #{custom-call.1} parent=0
    #allocation0 [shape = 's32[1]{0}', space=sflag, size = 0x4, scoped, tag = 'scoped memory for custom-call.1']
    %3 = vsyncpa [#allocation0], 0
    %s4 = sshll.u32 %s1, 4
    %s5 = int_to_ptr.vmem [resolvable:$true] %s4
    %7 = dma.hbm_to_vmem [thread:$0]  %s2, 432, %s5, [#allocation0]
    %8 = dma.done [#allocation0], 432
    %9 = vsyncpa [#allocation0], 1

// kernel: custom-call
$region0: #{custom-call}
  %s0 = inlined_call_operand.hbm [shape: c64[1,3,16,9], index: 0, kind: input, shape index: {}]
  %s1 = inlined_call_operand.vmem [shape: f32[1,3,16,9], index: 1, kind: output, shape index: {}]
  $region1: #{custom-call} parent=0
    #allocation0 [shape = 's32[1]{0}', space=sflag, size = 0x4, scoped, tag = 'scoped memory for custom-call']
    %2 = vsyncpa [#allocation0], 0
    %s3 = sshll.u32 %s1, 4
    %s4 = int_to_ptr.vmem [resolvable:$true] %s3
    %6 = dma.hbm_to_vmem [thread:$0]  %s0, 432, %s4, [#allocation0]
    %7 = dma.done [#allocation0], 432
    %8 = vsyncpa [#allocation0], 1

// kernel: _irfft2_forward.1
$region0: #{_irfft2_forward.1}
  #allocation0 [shape = 'u32[]', space=smem, size = 0x4, offset = 0x4, fixed_abs, tag = 'smem constant byte address 0x4 - core index']
  #allocation1 [shape = 'u32[144,128]{1,0:T(1,128)}', space=vmem, size = 0x12000, scoped, tag = 'internal scratch']
  %s0 = inlined_call_operand.vmem [shape: f32[48,18], index: 0, kind: input, shape index: {}]
  %s1 = inlined_call_operand.vmem [shape: f32[18,16], index: 1, kind: input, shape index: {}]
  %s2 = inlined_call_operand.vmem [shape: f32[18,16], index: 2, kind: input, shape index: {}]
  %s3 = inlined_call_operand.vmem [shape: f32[16,16], index: 3, kind: input, shape index: {}]
  %s4 = inlined_call_operand.vmem [shape: f32[16,16], index: 4, kind: input, shape index: {}]
  %s5 = inlined_call_operand.hbm [shape: f32[3,16,16], index: 5, kind: output, shape index: {}]
  %s6 = sld [smem:[#allocation0]]
  $region30: #{_irfft2_forward.1} parent=0
    _
  %s8 = ssub.s32 1, %s6
  %s9 = scalar_select 0, %s8, %s6
  $region1: #{_irfft2_forward.1} parent=0
    #allocation2 [shape = 'u8[24576]{0}', space=vmem, size = 0x6000, scoped, tag = 'output window, operand 0, single buffered']
    #allocation3 [shape = 's32[1]{0}', space=sflag, size = 0x4, scoped, tag = 'scoped memory for _irfft2_forward.1']
    %10 = vsyncpa [#allocation3], 0
    // Predicated region
    $region2: #{_irfft2_forward.1} parent=1 // pred_check
      _
    $region3: #{_irfft2_forward.1} parent=1 // pred_check_branch
      %12 = sbr.rel (0) target = $region5
    $region4: #{_irfft2_forward.1} parent=1 // pred_region
      _
    $region5: #{_irfft2_forward.1} parent=1 // pred_fallthru
      _
    // Predicated region
    $region6: #{_irfft2_forward.1} parent=1 // pred_check
      _
    $region7: #{_irfft2_forward.1} parent=1 // pred_check_branch
      %14 = sbr.rel (0) target = $region9
    $region8: #{_irfft2_forward.1} parent=1 // pred_region
      _
    $region9: #{_irfft2_forward.1} parent=1 // pred_fallthru
      _
    // Predicated region
    $region10: #{_irfft2_forward.1} parent=1 // pred_check
      _
    $region11: #{_irfft2_forward.1} parent=1 // pred_check_branch
      %16 = sbr.rel (0) target = $region13
    $region12: #{_irfft2_forward.1} parent=1 // pred_region
      _
    $region13: #{_irfft2_forward.1} parent=1 // pred_fallthru
      _
    // Predicated region
    $region14: #{_irfft2_forward.1} parent=1 // pred_check
      _
    $region15: #{_irfft2_forward.1} parent=1 // pred_check_branch
      %18 = sbr.rel (0) target = $region17
    $region16: #{_irfft2_forward.1} parent=1 // pred_region
      _
    $region17: #{_irfft2_forward.1} parent=1 // pred_fallthru
      _
    // Predicated region
    $region18: #{_irfft2_forward.1} parent=1 // pred_check
      _
    $region19: #{_irfft2_forward.1} parent=1 // pred_check_branch
      %20 = sbr.rel (0) target = $region21
    $region20: #{_irfft2_forward.1} parent=1 // pred_region
      _
    $region21: #{_irfft2_forward.1} parent=1 // pred_fallthru
      _
    %v21 = vld [vmem:[%s0] sm:$0xff]
    %v22 = vld [vmem:[%s0 + $0x8] sm:$0xff]
    %v23 = vld [vmem:[%s0 + $0x10] sm:$0xff]
    %v24 = vld [vmem:[%s0 + $0x18] sm:$0xff]
    %v25 = vld [vmem:[%s0 + $0x20] sm:$0xff]
    %v26 = vld [vmem:[%s0 + $0x28] sm:$0xff]
    %v27 = vld [vmem:[%s1] sm:$0xff]
    %v28 = vld [vmem:[%s1 + $0x8] sm:$0xff]
    %v29 = vld [vmem:[%s1 + $0x10] sm:$0x3]
    %vm30 = vcmask 146432
    %v32 = vsel %vm30, %v21, 0
    %v35 = vsel %vm30, %v22, 0
    %v38 = vsel %vm30, %v23, 0
    %v41 = vsel %vm30, %v24, 0
    %v44 = vsel %vm30, %v25, 0
    %v47 = vsel %vm30, %v26, 0
    %vm49 = vcmask 1041408
    %v51 = vsel %vm49, %v29, 0
    %53 = vmatprep.subr.mxu0 0.0
    %54 = vmatpush1.msra.mxu0 %v27
    %55 = vmatprep.subr.mxu0 0.0
    %56 = vmatpush1.msra.mxu0 %v28
    %57 = vmatprep.subr.mxu0 0.0
    %58 = vmatpush1.msra.mxu0 %v51
    %59 = vmatprep.subr.mxu0 0.0
    %60 = vmatpush1.msra.mxu0 0.0
    %61 = vmatprep.subr.mxu0 0.0
    %62 = vmatpush1.msra.mxu0 0.0
    %63 = vmatprep.subr.mxu0 0.0
    %64 = vmatpush1.msra.mxu0 0.0
    %65 = vmatprep.subr.mxu0 0.0
    %66 = vmatpush1.msra.mxu0 0.0
    %67 = vmatprep.subr.mxu0 0.0
    %68 = vmatpush1.msra.mxu0 0.0
    %69 = vmatprep.subr.mxu0 0.0
    %70 = vmatpush1.msra.mxu0 0.0
    %71 = vmatprep.subr.mxu0 0.0
    %72 = vmatpush1.msra.mxu0 0.0
    %73 = vmatprep.subr.mxu0 0.0
    %74 = vmatpush1.msra.mxu0 0.0
    %75 = vmatprep.subr.mxu0 0.0
    %76 = vmatpush1.msra.mxu0 0.0
    %77 = vmatprep.subr.mxu0 0.0
    %78 = vmatpush1.msra.mxu0 0.0
    %79 = vmatprep.subr.mxu0 0.0
    %80 = vmatpush1.msra.mxu0 0.0
    %81 = vmatprep.subr.mxu0 0.0
    %82 = vmatpush1.msra.mxu0 0.0
    %83 = vmatprep.subr.mxu0 0.0
    %84 = vmatpush1.msra.mxu0 0.0
    %85 = vmatprep.subr.mxu0 0.0
    %86 = vmatpush1.msra.mxu0 0.0
    %87 = vmatprep.subr.mxu0 0.0
    %88 = vmatpush1.msra.mxu0 0.0
    %89 = vmatprep.subr.mxu0 0.0
    %90 = vmatpush1.msra.mxu0 0.0
    %91 = vmatprep.subr.mxu0 0.0
    %92 = vmatpush1.msra.mxu0 0.0
    %93 = vmatprep.subr.mxu0 0.0
    %94 = vmatpush1.msra.mxu0 0.0
    %95 = vmatprep.subr.mxu0 0.0
    %96 = vmatpush1.msra.mxu0 0.0
    %97 = vmatprep.subr.mxu0 0.0
    %98 = vmatpush1.msra.mxu0 0.0
    %99 = vmatprep.subr.mxu0 0.0
    %100 = vmatpush1.msra.mxu0 0.0
    %101 = vmatprep.subr.mxu0 0.0
    %102 = vmatpush1.msra.mxu0 0.0
    %103 = vmatprep.subr.mxu0 0.0
    %104 = vmatpush1.msra.mxu0 0.0
    %105 = vmatprep.subr.mxu0 0.0
    %106 = vmatpush1.msra.mxu0 0.0
    %107 = vmatprep.subr.mxu0 0.0
    %108 = vmatpush1.msra.mxu0 0.0
    %109 = vmatprep.subr.mxu0 0.0
    %110 = vmatpush1.msra.mxu0 0.0
    %111 = vmatprep.subr.mxu0 0.0
    %112 = vmatpush1.msra.mxu0 0.0
    %113 = vmatprep.subr.mxu0 0.0
    %114 = vmatpush1.msra.mxu0 0.0
    %115 = vmatprep.subr.mxu0 0.0
    %116 = vmatpush1.msra.mxu0 0.0
    %117 = vmatprep.mubr.f32.mxu0 0.0
    %118 = vmatmul.mubr.f32.gmra.mrb[0].mxu0 %v32
    %v119 = vpop.f32.mrb[0].mxu0
    %v120 = vadd.f32 0.0, %v119
    %v121 = vpop.f32.mrb[0].mxu0
    %122 = vmatprep.mubr.f32.mxu0 0.0
    %123 = vmatmul.mubr.f32.gmra.mrb[0].mxu0 %v35
    %v124 = vpop.f32.mrb[0].mxu0
    %v125 = vadd.f32 0.0, %v124
    %v126 = vpop.f32.mrb[0].mxu0
    %127 = vmatprep.mubr.f32.mxu0 0.0
    %128 = vmatmul.mubr.f32.gmra.mrb[0].mxu0 %v38
    %v129 = vpop.f32.mrb[0].mxu0
    %v130 = vadd.f32 0.0, %v129
    %v131 = vpop.f32.mrb[0].mxu0
    %132 = vmatprep.mubr.f32.mxu0 0.0
    %133 = vmatmul.mubr.f32.gmra.mrb[0].mxu0 %v41
    %v134 = vpop.f32.mrb[0].mxu0
    %v135 = vadd.f32 0.0, %v134
    %v136 = vpop.f32.mrb[0].mxu0
    %137 = vmatprep.mubr.f32.mxu0 0.0
    %138 = vmatmul.mubr.f32.gmra.mrb[0].mxu0 %v44
    %v139 = vpop.f32.mrb[0].mxu0
    %v140 = vadd.f32 0.0, %v139
    %v141 = vpop.f32.mrb[0].mxu0
    %142 = vmatprep.mubr.f32.mxu0 0.0
    %143 = vmatmul.mubr.f32.gmra.mrb[0].mxu0 %v47
    %v144 = vpop.f32.mrb[0].mxu0
    %v145 = vadd.f32 0.0, %v144
    %v146 = vpop.f32.mrb[0].mxu0
    %147 = vdwg.mxu0
    %v148 = vld [vmem:[%s2] sm:$0xff]
    %v149 = vld [vmem:[%s2 + $0x8] sm:$0xff]
    %v150 = vld [vmem:[%s2 + $0x10] sm:$0x3]
    %v152 = vsel %vm49, %v150, 0
    %154 = vmatprep.subr.mxu0 0.0
    %155 = vmatpush1.msra.mxu0 %v148
    %156 = vmatprep.subr.mxu0 0.0
    %157 = vmatpush1.msra.mxu0 %v149
    %158 = vmatprep.subr.mxu0 0.0
    %159 = vmatpush1.msra.mxu0 %v152
    %160 = vmatprep.subr.mxu0 0.0
    %161 = vmatpush1.msra.mxu0 0.0
    %162 = vmatprep.subr.mxu0 0.0
    %163 = vmatpush1.msra.mxu0 0.0
    %164 = vmatprep.subr.mxu0 0.0
    %165 = vmatpush1.msra.mxu0 0.0
    %166 = vmatprep.subr.mxu0 0.0
    %167 = vmatpush1.msra.mxu0 0.0
    %168 = vmatprep.subr.mxu0 0.0
    %169 = vmatpush1.msra.mxu0 0.0
    %170 = vmatprep.subr.mxu0 0.0
    %171 = vmatpush1.msra.mxu0 0.0
    %172 = vmatprep.subr.mxu0 0.0
    %173 = vmatpush1.msra.mxu0 0.0
    %174 = vmatprep.subr.mxu0 0.0
    %175 = vmatpush1.msra.mxu0 0.0
    %176 = vmatprep.subr.mxu0 0.0
    %177 = vmatpush1.msra.mxu0 0.0
    %178 = vmatprep.subr.mxu0 0.0
    %179 = vmatpush1.msra.mxu0 0.0
    %180 = vmatprep.subr.mxu0 0.0
    %181 = vmatpush1.msra.mxu0 0.0
    %182 = vmatprep.subr.mxu0 0.0
    %183 = vmatpush1.msra.mxu0 0.0
    %184 = vmatprep.subr.mxu0 0.0
    %185 = vmatpush1.msra.mxu0 0.0
    %186 = vmatprep.subr.mxu0 0.0
    %187 = vmatpush1.msra.mxu0 0.0
    %188 = vmatprep.subr.mxu0 0.0
    %189 = vmatpush1.msra.mxu0 0.0
    %190 = vmatprep.subr.mxu0 0.0
    %191 = vmatpush1.msra.mxu0 0.0
    %192 = vmatprep.subr.mxu0 0.0
    %193 = vmatpush1.msra.mxu0 0.0
    %194 = vmatprep.subr.mxu0 0.0
    %195 = vmatpush1.msra.mxu0 0.0
    %196 = vmatprep.subr.mxu0 0.0
    %197 = vmatpush1.msra.mxu0 0.0
    %198 = vmatprep.subr.mxu0 0.0
    %199 = vmatpush1.msra.mxu0 0.0
    %200 = vmatprep.subr.mxu0 0.0
    %201 = vmatpush1.msra.mxu0 0.0
    %202 = vmatprep.subr.mxu0 0.0
    %203 = vmatpush1.msra.mxu0 0.0
    %204 = vmatprep.subr.mxu0 0.0
    %205 = vmatpush1.msra.mxu0 0.0
    %206 = vmatprep.subr.mxu0 0.0
    %207 = vmatpush1.msra.mxu0 0.0
    %208 = vmatprep.subr.mxu0 0.0
    %209 = vmatpush1.msra.mxu0 0.0
    %210 = vmatprep.subr.mxu0 0.0
    %211 = vmatpush1.msra.mxu0 0.0
    %212 = vmatprep.subr.mxu0 0.0
    %213 = vmatpush1.msra.mxu0 0.0
    %214 = vmatprep.subr.mxu0 0.0
    %215 = vmatpush1.msra.mxu0 0.0
    %216 = vmatprep.subr.mxu0 0.0
    %217 = vmatpush1.msra.mxu0 0.0
    %218 = vmatprep.mubr.f32.mxu0 0.0
    %219 = vmatmul.mubr.f32.gmra.mrb[0].mxu0 %v32
    %v220 = vpop.f32.mrb[0].mxu0
    %v221 = vadd.f32 0.0, %v220
    %v222 = vpop.f32.mrb[0].mxu0
    %223 = vmatprep.mubr.f32.mxu0 0.0
    %224 = vmatmul.mubr.f32.gmra.mrb[0].mxu0 %v35
    %v225 = vpop.f32.mrb[0].mxu0
    %v226 = vadd.f32 0.0, %v225
    %v227 = vpop.f32.mrb[0].mxu0
    %228 = vmatprep.mubr.f32.mxu0 0.0
    %229 = vmatmul.mubr.f32.gmra.mrb[0].mxu0 %v38
    %v230 = vpop.f32.mrb[0].mxu0
    %v231 = vadd.f32 0.0, %v230
    %v232 = vpop.f32.mrb[0].mxu0
    %233 = vmatprep.mubr.f32.mxu0 0.0
    %234 = vmatmul.mubr.f32.gmra.mrb[0].mxu0 %v41
    %v235 = vpop.f32.mrb[0].mxu0
    %v236 = vadd.f32 0.0, %v235
    %v237 = vpop.f32.mrb[0].mxu0
    %238 = vmatprep.mubr.f32.mxu0 0.0
    %239 = vmatmul.mubr.f32.gmra.mrb[0].mxu0 %v44
    %v240 = vpop.f32.mrb[0].mxu0
    %v241 = vadd.f32 0.0, %v240
    %v242 = vpop.f32.mrb[0].mxu0
    %243 = vmatprep.mubr.f32.mxu0 0.0
    %244 = vmatmul.mubr.f32.gmra.mrb[0].mxu0 %v47
    %v245 = vpop.f32.mrb[0].mxu0
    %v246 = vadd.f32 0.0, %v245
    %v247 = vpop.f32.mrb[0].mxu0
    %248 = vdwg.mxu0
    %v249 = vld [vmem:[%s3] sm:$0xff]
    %v250 = vld [vmem:[%s3 + $0x8] sm:$0xff]
    %v251 = vld [vmem:[%s4] sm:$0xff]
    %v252 = vld [vmem:[%s4 + $0x8] sm:$0xff]
    %vm253 = vcmask 130048
    %v255 = vsel %vm253, %v249, 0
    %v258 = vsel %vm253, %v250, 0
    %260 = vmatprep.subr.mxu0 0.0
    %261 = vmatpush1.msra.mxu0 %v120
    %262 = vmatprep.subr.mxu0 0.0
    %263 = vmatpush1.msra.mxu0 %v125
    %264 = vmatprep.subr.mxu0 0.0
    %265 = vmatpush1.msra.mxu0 0.0
    %266 = vmatprep.subr.mxu0 0.0
    %267 = vmatpush1.msra.mxu0 0.0
    %268 = vmatprep.subr.mxu0 0.0
    %269 = vmatpush1.msra.mxu0 0.0
    %270 = vmatprep.subr.mxu0 0.0
    %271 = vmatpush1.msra.mxu0 0.0
    %272 = vmatprep.subr.mxu0 0.0
    %273 = vmatpush1.msra.mxu0 0.0
    %274 = vmatprep.subr.mxu0 0.0
    %275 = vmatpush1.msra.mxu0 0.0
    %276 = vmatprep.subr.mxu0 0.0
    %277 = vmatpush1.msra.mxu0 0.0
    %278 = vmatprep.subr.mxu0 0.0
    %279 = vmatpush1.msra.mxu0 0.0
    %280 = vmatprep.subr.mxu0 0.0
    %281 = vmatpush1.msra.mxu0 0.0
    %282 = vmatprep.subr.mxu0 0.0
    %283 = vmatpush1.msra.mxu0 0.0
    %284 = vmatprep.subr.mxu0 0.0
    %285 = vmatpush1.msra.mxu0 0.0
    %286 = vmatprep.subr.mxu0 0.0
    %287 = vmatpush1.msra.mxu0 0.0
    %288 = vmatprep.subr.mxu0 0.0
    %289 = vmatpush1.msra.mxu0 0.0
    %290 = vmatprep.subr.mxu0 0.0
    %291 = vmatpush1.msra.mxu0 0.0
    %292 = vmatprep.subr.mxu0 0.0
    %293 = vmatpush1.msra.mxu0 0.0
    %294 = vmatprep.subr.mxu0 0.0
    %295 = vmatpush1.msra.mxu0 0.0
    %296 = vmatprep.subr.mxu0 0.0
    %297 = vmatpush1.msra.mxu0 0.0
    %298 = vmatprep.subr.mxu0 0.0
    %299 = vmatpush1.msra.mxu0 0.0
    %300 = vmatprep.subr.mxu0 0.0
    %301 = vmatpush1.msra.mxu0 0.0
    %302 = vmatprep.subr.mxu0 0.0
    %303 = vmatpush1.msra.mxu0 0.0
    %304 = vmatprep.subr.mxu0 0.0
    %305 = vmatpush1.msra.mxu0 0.0
    %306 = vmatprep.subr.mxu0 0.0
    %307 = vmatpush1.msra.mxu0 0.0
    %308 = vmatprep.subr.mxu0 0.0
    %309 = vmatpush1.msra.mxu0 0.0
    %310 = vmatprep.subr.mxu0 0.0
    %311 = vmatpush1.msra.mxu0 0.0
    %312 = vmatprep.subr.mxu0 0.0
    %313 = vmatpush1.msra.mxu0 0.0
    %314 = vmatprep.subr.mxu0 0.0
    %315 = vmatpush1.msra.mxu0 0.0
    %316 = vmatprep.subr.mxu0 0.0
    %317 = vmatpush1.msra.mxu0 0.0
    %318 = vmatprep.subr.mxu0 0.0
    %319 = vmatpush1.msra.mxu0 0.0
    %320 = vmatprep.subr.mxu0 0.0
    %321 = vmatpush1.msra.mxu0 0.0
    %322 = vmatprep.subr.mxu0 0.0
    %323 = vmatpush1.msra.mxu0 0.0
    %324 = vmatprep.mubr.f32.mxu0 0.0
    %325 = vmatmul.mubr.f32.gmra.mrb[0].mxu0 %v255
    %v326 = vpop.f32.mrb[0].mxu0
    %v327 = vadd.f32 0.0, %v326
    %v328 = vpop.f32.mrb[0].mxu0
    %329 = vmatprep.mubr.f32.mxu0 0.0
    %330 = vmatmul.mubr.f32.gmra.mrb[0].mxu0 %v258
    %v331 = vpop.f32.mrb[0].mxu0
    %v332 = vadd.f32 0.0, %v331
    %v333 = vpop.f32.mrb[0].mxu0
    %334 = vdwg.mxu0
    %v336 = vsel %vm253, %v251, 0
    %v339 = vsel %vm253, %v252, 0
    %341 = vmatprep.subr.mxu0 0.0
    %342 = vmatpush1.msra.mxu0 %v221
    %343 = vmatprep.subr.mxu0 0.0
    %344 = vmatpush1.msra.mxu0 %v226
    %345 = vmatprep.subr.mxu0 0.0
    %346 = vmatpush1.msra.mxu0 0.0
    %347 = vmatprep.subr.mxu0 0.0
    %348 = vmatpush1.msra.mxu0 0.0
    %349 = vmatprep.subr.mxu0 0.0
    %350 = vmatpush1.msra.mxu0 0.0
    %351 = vmatprep.subr.mxu0 0.0
    %352 = vmatpush1.msra.mxu0 0.0
    %353 = vmatprep.subr.mxu0 0.0
    %354 = vmatpush1.msra.mxu0 0.0
    %355 = vmatprep.subr.mxu0 0.0
    %356 = vmatpush1.msra.mxu0 0.0
    %357 = vmatprep.subr.mxu0 0.0
    %358 = vmatpush1.msra.mxu0 0.0
    %359 = vmatprep.subr.mxu0 0.0
    %360 = vmatpush1.msra.mxu0 0.0
    %361 = vmatprep.subr.mxu0 0.0
    %362 = vmatpush1.msra.mxu0 0.0
    %363 = vmatprep.subr.mxu0 0.0
    %364 = vmatpush1.msra.mxu0 0.0
    %365 = vmatprep.subr.mxu0 0.0
    %366 = vmatpush1.msra.mxu0 0.0
    %367 = vmatprep.subr.mxu0 0.0
    %368 = vmatpush1.msra.mxu0 0.0
    %369 = vmatprep.subr.mxu0 0.0
    %370 = vmatpush1.msra.mxu0 0.0
    %371 = vmatprep.subr.mxu0 0.0
    %372 = vmatpush1.msra.mxu0 0.0
    %373 = vmatprep.subr.mxu0 0.0
    %374 = vmatpush1.msra.mxu0 0.0
    %375 = vmatprep.subr.mxu0 0.0
    %376 = vmatpush1.msra.mxu0 0.0
    %377 = vmatprep.subr.mxu0 0.0
    %378 = vmatpush1.msra.mxu0 0.0
    %379 = vmatprep.subr.mxu0 0.0
    %380 = vmatpush1.msra.mxu0 0.0
    %381 = vmatprep.subr.mxu0 0.0
    %382 = vmatpush1.msra.mxu0 0.0
    %383 = vmatprep.subr.mxu0 0.0
    %384 = vmatpush1.msra.mxu0 0.0
    %385 = vmatprep.subr.mxu0 0.0
    %386 = vmatpush1.msra.mxu0 0.0
    %387 = vmatprep.subr.mxu0 0.0
    %388 = vmatpush1.msra.mxu0 0.0
    %389 = vmatprep.subr.mxu0 0.0
    %390 = vmatpush1.msra.mxu0 0.0
    %391 = vmatprep.subr.mxu0 0.0
    %392 = vmatpush1.msra.mxu0 0.0
    %393 = vmatprep.subr.mxu0 0.0
    %394 = vmatpush1.msra.mxu0 0.0
    %395 = vmatprep.subr.mxu0 0.0
    %396 = vmatpush1.msra.mxu0 0.0
    %397 = vmatprep.subr.mxu0 0.0
    %398 = vmatpush1.msra.mxu0 0.0
    %399 = vmatprep.subr.mxu0 0.0
    %400 = vmatpush1.msra.mxu0 0.0
    %401 = vmatprep.subr.mxu0 0.0
    %402 = vmatpush1.msra.mxu0 0.0
    %403 = vmatprep.subr.mxu0 0.0
    %404 = vmatpush1.msra.mxu0 0.0
    %405 = vmatprep.mubr.f32.mxu0 0.0
    %406 = vmatmul.mubr.f32.gmra.mrb[0].mxu0 %v336
    %v407 = vpop.f32.mrb[0].mxu0
    %v408 = vadd.f32 0.0, %v407
    %v409 = vpop.f32.mrb[0].mxu0
    %410 = vmatprep.mubr.f32.mxu0 0.0
    %411 = vmatmul.mubr.f32.gmra.mrb[0].mxu0 %v339
    %v412 = vpop.f32.mrb[0].mxu0
    %v413 = vadd.f32 0.0, %v412
    %v414 = vpop.f32.mrb[0].mxu0
    %415 = vdwg.mxu0
    %v416 = vsub.f32 %v327, %v408
    %v417 = vsub.f32 %v332, %v413
    %418 = vst.msk [vmem:[#allocation2] sm:$0xff] %vm253, %v416
    %419 = vst.msk [vmem:[#allocation2 + $0x8] sm:$0xff] %vm253, %v417
    %420 = vmatprep.subr.mxu0 0.0
    %421 = vmatpush1.msra.mxu0 %v130
    %422 = vmatprep.subr.mxu0 0.0
    %423 = vmatpush1.msra.mxu0 %v135
    %424 = vmatprep.subr.mxu0 0.0
    %425 = vmatpush1.msra.mxu0 0.0
    %426 = vmatprep.subr.mxu0 0.0
    %427 = vmatpush1.msra.mxu0 0.0
    %428 = vmatprep.subr.mxu0 0.0
    %429 = vmatpush1.msra.mxu0 0.0
    %430 = vmatprep.subr.mxu0 0.0
    %431 = vmatpush1.msra.mxu0 0.0
    %432 = vmatprep.subr.mxu0 0.0
    %433 = vmatpush1.msra.mxu0 0.0
    %434 = vmatprep.subr.mxu0 0.0
    %435 = vmatpush1.msra.mxu0 0.0
    %436 = vmatprep.subr.mxu0 0.0
    %437 = vmatpush1.msra.mxu0 0.0
    %438 = vmatprep.subr.mxu0 0.0
    %439 = vmatpush1.msra.mxu0 0.0
    %440 = vmatprep.subr.mxu0 0.0
    %441 = vmatpush1.msra.mxu0 0.0
    %442 = vmatprep.subr.mxu0 0.0
    %443 = vmatpush1.msra.mxu0 0.0
    %444 = vmatprep.subr.mxu0 0.0
    %445 = vmatpush1.msra.mxu0 0.0
    %446 = vmatprep.subr.mxu0 0.0
    %447 = vmatpush1.msra.mxu0 0.0
    %448 = vmatprep.subr.mxu0 0.0
    %449 = vmatpush1.msra.mxu0 0.0
    %450 = vmatprep.subr.mxu0 0.0
    %451 = vmatpush1.msra.mxu0 0.0
    %452 = vmatprep.subr.mxu0 0.0
    %453 = vmatpush1.msra.mxu0 0.0
    %454 = vmatprep.subr.mxu0 0.0
    %455 = vmatpush1.msra.mxu0 0.0
    %456 = vmatprep.subr.mxu0 0.0
    %457 = vmatpush1.msra.mxu0 0.0
    %458 = vmatprep.subr.mxu0 0.0
    %459 = vmatpush1.msra.mxu0 0.0
    %460 = vmatprep.subr.mxu0 0.0
    %461 = vmatpush1.msra.mxu0 0.0
    %462 = vmatprep.subr.mxu0 0.0
    %463 = vmatpush1.msra.mxu0 0.0
    %464 = vmatprep.subr.mxu0 0.0
    %465 = vmatpush1.msra.mxu0 0.0
    %466 = vmatprep.subr.mxu0 0.0
    %467 = vmatpush1.msra.mxu0 0.0
    %468 = vmatprep.subr.mxu0 0.0
    %469 = vmatpush1.msra.mxu0 0.0
    %470 = vmatprep.subr.mxu0 0.0
    %471 = vmatpush1.msra.mxu0 0.0
    %472 = vmatprep.subr.mxu0 0.0
    %473 = vmatpush1.msra.mxu0 0.0
    %474 = vmatprep.subr.mxu0 0.0
    %475 = vmatpush1.msra.mxu0 0.0
    %476 = vmatprep.subr.mxu0 0.0
    %477 = vmatpush1.msra.mxu0 0.0
    %478 = vmatprep.subr.mxu0 0.0
    %479 = vmatpush1.msra.mxu0 0.0
    %480 = vmatprep.subr.mxu0 0.0
    %481 = vmatpush1.msra.mxu0 0.0
    %482 = vmatprep.subr.mxu0 0.0
    %483 = vmatpush1.msra.mxu0 0.0
    %484 = vmatprep.mubr.f32.mxu0 0.0
    %485 = vmatmul.mubr.f32.gmra.mrb[0].mxu0 %v255
    %v486 = vpop.f32.mrb[0].mxu0
    %v487 = vadd.f32 0.0, %v486
    %v488 = vpop.f32.mrb[0].mxu0
    %489 = vmatprep.mubr.f32.mxu0 0.0
    %490 = vmatmul.mubr.f32.gmra.mrb[0].mxu0 %v258
    %v491 = vpop.f32.mrb[0].mxu0
    %v492 = vadd.f32 0.0, %v491
    %v493 = vpop.f32.mrb[0].mxu0
    %494 = vdwg.mxu0
    %495 = vmatprep.subr.mxu0 0.0
    %496 = vmatpush1.msra.mxu0 %v231
    %497 = vmatprep.subr.mxu0 0.0
    %498 = vmatpush1.msra.mxu0 %v236
    %499 = vmatprep.subr.mxu0 0.0
    %500 = vmatpush1.msra.mxu0 0.0
    %501 = vmatprep.subr.mxu0 0.0
    %502 = vmatpush1.msra.mxu0 0.0
    %503 = vmatprep.subr.mxu0 0.0
    %504 = vmatpush1.msra.mxu0 0.0
    %505 = vmatprep.subr.mxu0 0.0
    %506 = vmatpush1.msra.mxu0 0.0
    %507 = vmatprep.subr.mxu0 0.0
    %508 = vmatpush1.msra.mxu0 0.0
    %509 = vmatprep.subr.mxu0 0.0
    %510 = vmatpush1.msra.mxu0 0.0
    %511 = vmatprep.subr.mxu0 0.0
    %512 = vmatpush1.msra.mxu0 0.0
    %513 = vmatprep.subr.mxu0 0.0
    %514 = vmatpush1.msra.mxu0 0.0
    %515 = vmatprep.subr.mxu0 0.0
    %516 = vmatpush1.msra.mxu0 0.0
    %517 = vmatprep.subr.mxu0 0.0
    %518 = vmatpush1.msra.mxu0 0.0
    %519 = vmatprep.subr.mxu0 0.0
    %520 = vmatpush1.msra.mxu0 0.0
    %521 = vmatprep.subr.mxu0 0.0
    %522 = vmatpush1.msra.mxu0 0.0
    %523 = vmatprep.subr.mxu0 0.0
    %524 = vmatpush1.msra.mxu0 0.0
    %525 = vmatprep.subr.mxu0 0.0
    %526 = vmatpush1.msra.mxu0 0.0
    %527 = vmatprep.subr.mxu0 0.0
    %528 = vmatpush1.msra.mxu0 0.0
    %529 = vmatprep.subr.mxu0 0.0
    %530 = vmatpush1.msra.mxu0 0.0
    %531 = vmatprep.subr.mxu0 0.0
    %532 = vmatpush1.msra.mxu0 0.0
    %533 = vmatprep.subr.mxu0 0.0
    %534 = vmatpush1.msra.mxu0 0.0
    %535 = vmatprep.subr.mxu0 0.0
    %536 = vmatpush1.msra.mxu0 0.0
    %537 = vmatprep.subr.mxu0 0.0
    %538 = vmatpush1.msra.mxu0 0.0
    %539 = vmatprep.subr.mxu0 0.0
    %540 = vmatpush1.msra.mxu0 0.0
    %541 = vmatprep.subr.mxu0 0.0
    %542 = vmatpush1.msra.mxu0 0.0
    %543 = vmatprep.subr.mxu0 0.0
    %544 = vmatpush1.msra.mxu0 0.0
    %545 = vmatprep.subr.mxu0 0.0
    %546 = vmatpush1.msra.mxu0 0.0
    %547 = vmatprep.subr.mxu0 0.0
    %548 = vmatpush1.msra.mxu0 0.0
    %549 = vmatprep.subr.mxu0 0.0
    %550 = vmatpush1.msra.mxu0 0.0
    %551 = vmatprep.subr.mxu0 0.0
    %552 = vmatpush1.msra.mxu0 0.0
    %553 = vmatprep.subr.mxu0 0.0
    %554 = vmatpush1.msra.mxu0 0.0
    %555 = vmatprep.subr.mxu0 0.0
    %556 = vmatpush1.msra.mxu0 0.0
    %557 = vmatprep.subr.mxu0 0.0
    %558 = vmatpush1.msra.mxu0 0.0
    %559 = vmatprep.mubr.f32.mxu0 0.0
    %560 = vmatmul.mubr.f32.gmra.mrb[0].mxu0 %v336
    %v561 = vpop.f32.mrb[0].mxu0
    %v562 = vadd.f32 0.0, %v561
    %v563 = vpop.f32.mrb[0].mxu0
    %564 = vmatprep.mubr.f32.mxu0 0.0
    %565 = vmatmul.mubr.f32.gmra.mrb[0].mxu0 %v339
    %v566 = vpop.f32.mrb[0].mxu0
    %v567 = vadd.f32 0.0, %v566
    %v568 = vpop.f32.mrb[0].mxu0
    %569 = vdwg.mxu0
    %v570 = vsub.f32 %v487, %v562
    %v571 = vsub.f32 %v492, %v567
    %s572 = scalar_lea.vmem [#allocation2], 16
    %573 = vst.msk [vmem:[%s572] sm:$0xff] %vm253, %v570
    %574 = vst.msk [vmem:[%s572 + $0x8] sm:$0xff] %vm253, %v571
    %575 = vmatprep.subr.mxu0 0.0
    %576 = vmatpush1.msra.mxu0 %v140
    %577 = vmatprep.subr.mxu0 0.0
    %578 = vmatpush1.msra.mxu0 %v145
    %579 = vmatprep.subr.mxu0 0.0
    %580 = vmatpush1.msra.mxu0 0.0
    %581 = vmatprep.subr.mxu0 0.0
    %582 = vmatpush1.msra.mxu0 0.0
    %583 = vmatprep.subr.mxu0 0.0
    %584 = vmatpush1.msra.mxu0 0.0
    %585 = vmatprep.subr.mxu0 0.0
    %586 = vmatpush1.msra.mxu0 0.0
    %587 = vmatprep.subr.mxu0 0.0
    %588 = vmatpush1.msra.mxu0 0.0
    %589 = vmatprep.subr.mxu0 0.0
    %590 = vmatpush1.msra.mxu0 0.0
    %591 = vmatprep.subr.mxu0 0.0
    %592 = vmatpush1.msra.mxu0 0.0
    %593 = vmatprep.subr.mxu0 0.0
    %594 = vmatpush1.msra.mxu0 0.0
    %595 = vmatprep.subr.mxu0 0.0
    %596 = vmatpush1.msra.mxu0 0.0
    %597 = vmatprep.subr.mxu0 0.0
    %598 = vmatpush1.msra.mxu0 0.0
    %599 = vmatprep.subr.mxu0 0.0
    %600 = vmatpush1.msra.mxu0 0.0
    %601 = vmatprep.subr.mxu0 0.0
    %602 = vmatpush1.msra.mxu0 0.0
    %603 = vmatprep.subr.mxu0 0.0
    %604 = vmatpush1.msra.mxu0 0.0
    %605 = vmatprep.subr.mxu0 0.0
    %606 = vmatpush1.msra.mxu0 0.0
    %607 = vmatprep.subr.mxu0 0.0
    %608 = vmatpush1.msra.mxu0 0.0
    %609 = vmatprep.subr.mxu0 0.0
    %610 = vmatpush1.msra.mxu0 0.0
    %611 = vmatprep.subr.mxu0 0.0
    %612 = vmatpush1.msra.mxu0 0.0
    %613 = vmatprep.subr.mxu0 0.0
    %614 = vmatpush1.msra.mxu0 0.0
    %615 = vmatprep.subr.mxu0 0.0
    %616 = vmatpush1.msra.mxu0 0.0
    %617 = vmatprep.subr.mxu0 0.0
    %618 = vmatpush1.msra.mxu0 0.0
    %619 = vmatprep.subr.mxu0 0.0
    %620 = vmatpush1.msra.mxu0 0.0
    %621 = vmatprep.subr.mxu0 0.0
    %622 = vmatpush1.msra.mxu0 0.0
    %623 = vmatprep.subr.mxu0 0.0
    %624 = vmatpush1.msra.mxu0 0.0
    %625 = vmatprep.subr.mxu0 0.0
    %626 = vmatpush1.msra.mxu0 0.0
    %627 = vmatprep.subr.mxu0 0.0
    %628 = vmatpush1.msra.mxu0 0.0
    %629 = vmatprep.subr.mxu0 0.0
    %630 = vmatpush1.msra.mxu0 0.0
    %631 = vmatprep.subr.mxu0 0.0
    %632 = vmatpush1.msra.mxu0 0.0
    %633 = vmatprep.subr.mxu0 0.0
    %634 = vmatpush1.msra.mxu0 0.0
    %635 = vmatprep.subr.mxu0 0.0
    %636 = vmatpush1.msra.mxu0 0.0
    %637 = vmatprep.subr.mxu0 0.0
    %638 = vmatpush1.msra.mxu0 0.0
    %639 = vmatprep.mubr.f32.mxu0 0.0
    %640 = vmatmul.mubr.f32.gmra.mrb[0].mxu0 %v255
    %v641 = vpop.f32.mrb[0].mxu0
    %v642 = vadd.f32 0.0, %v641
    %v643 = vpop.f32.mrb[0].mxu0
    %644 = vmatprep.mubr.f32.mxu0 0.0
    %645 = vmatmul.mubr.f32.gmra.mrb[0].mxu0 %v258
    %v646 = vpop.f32.mrb[0].mxu0
    %v647 = vadd.f32 0.0, %v646
    %v648 = vpop.f32.mrb[0].mxu0
    %649 = vdwg.mxu0
    %650 = vmatprep.subr.mxu0 0.0
    %651 = vmatpush1.msra.mxu0 %v241
    %652 = vmatprep.subr.mxu0 0.0
    %653 = vmatpush1.msra.mxu0 %v246
    %654 = vmatprep.subr.mxu0 0.0
    %655 = vmatpush1.msra.mxu0 0.0
    %656 = vmatprep.subr.mxu0 0.0
    %657 = vmatpush1.msra.mxu0 0.0
    %658 = vmatprep.subr.mxu0 0.0
    %659 = vmatpush1.msra.mxu0 0.0
    %660 = vmatprep.subr.mxu0 0.0
    %661 = vmatpush1.msra.mxu0 0.0
    %662 = vmatprep.subr.mxu0 0.0
    %663 = vmatpush1.msra.mxu0 0.0
    %664 = vmatprep.subr.mxu0 0.0
    %665 = vmatpush1.msra.mxu0 0.0
    %666 = vmatprep.subr.mxu0 0.0
    %667 = vmatpush1.msra.mxu0 0.0
    %668 = vmatprep.subr.mxu0 0.0
    %669 = vmatpush1.msra.mxu0 0.0
    %670 = vmatprep.subr.mxu0 0.0
    %671 = vmatpush1.msra.mxu0 0.0
    %672 = vmatprep.subr.mxu0 0.0
    %673 = vmatpush1.msra.mxu0 0.0
    %674 = vmatprep.subr.mxu0 0.0
    %675 = vmatpush1.msra.mxu0 0.0
    %676 = vmatprep.subr.mxu0 0.0
    %677 = vmatpush1.msra.mxu0 0.0
    %678 = vmatprep.subr.mxu0 0.0
    %679 = vmatpush1.msra.mxu0 0.0
    %680 = vmatprep.subr.mxu0 0.0
    %681 = vmatpush1.msra.mxu0 0.0
    %682 = vmatprep.subr.mxu0 0.0
    %683 = vmatpush1.msra.mxu0 0.0
    %684 = vmatprep.subr.mxu0 0.0
    %685 = vmatpush1.msra.mxu0 0.0
    %686 = vmatprep.subr.mxu0 0.0
    %687 = vmatpush1.msra.mxu0 0.0
    %688 = vmatprep.subr.mxu0 0.0
    %689 = vmatpush1.msra.mxu0 0.0
    %690 = vmatprep.subr.mxu0 0.0
    %691 = vmatpush1.msra.mxu0 0.0
    %692 = vmatprep.subr.mxu0 0.0
    %693 = vmatpush1.msra.mxu0 0.0
    %694 = vmatprep.subr.mxu0 0.0
    %695 = vmatpush1.msra.mxu0 0.0
    %696 = vmatprep.subr.mxu0 0.0
    %697 = vmatpush1.msra.mxu0 0.0
    %698 = vmatprep.subr.mxu0 0.0
    %699 = vmatpush1.msra.mxu0 0.0
    %700 = vmatprep.subr.mxu0 0.0
    %701 = vmatpush1.msra.mxu0 0.0
    %702 = vmatprep.subr.mxu0 0.0
    %703 = vmatpush1.msra.mxu0 0.0
    %704 = vmatprep.subr.mxu0 0.0
    %705 = vmatpush1.msra.mxu0 0.0
    %706 = vmatprep.subr.mxu0 0.0
    %707 = vmatpush1.msra.mxu0 0.0
    %708 = vmatprep.subr.mxu0 0.0
    %709 = vmatpush1.msra.mxu0 0.0
    %710 = vmatprep.subr.mxu0 0.0
    %711 = vmatpush1.msra.mxu0 0.0
    %712 = vmatprep.subr.mxu0 0.0
    %713 = vmatpush1.msra.mxu0 0.0
    %714 = vmatprep.mubr.f32.mxu0 0.0
    %715 = vmatmul.mubr.f32.gmra.mrb[0].mxu0 %v336
    %v716 = vpop.f32.mrb[0].mxu0
    %v717 = vadd.f32 0.0, %v716
    %v718 = vpop.f32.mrb[0].mxu0
    %719 = vmatprep.mubr.f32.mxu0 0.0
    %720 = vmatmul.mubr.f32.gmra.mrb[0].mxu0 %v339
    %v721 = vpop.f32.mrb[0].mxu0
    %v722 = vadd.f32 0.0, %v721
    %v723 = vpop.f32.mrb[0].mxu0
    %724 = vdwg.mxu0
    %v725 = vsub.f32 %v642, %v717
    %v726 = vsub.f32 %v647, %v722
    %s727 = scalar_lea.vmem [#allocation2], 32
    %728 = vst.msk [vmem:[%s727] sm:$0xff] %vm253, %v725
    %729 = vst.msk [vmem:[%s727 + $0x8] sm:$0xff] %vm253, %v726
    // Predicated region
    $region22: #{_irfft2_forward.1} parent=1 // pred_check
      _
    $region23: #{_irfft2_forward.1} parent=1 // pred_check_branch
      %731 = sbr.rel (0) target = $region25
    $region24: #{_irfft2_forward.1} parent=1 // pred_region
      %s733 = ssub.s32 768, 768
      %734 = vsyncadd [#allocation3], %s733
      %s735 = sshll.u32 [#allocation2], 4
      %s736 = int_to_ptr.vmem [resolvable:$true] %s735
      %741 = dma.vmem_to_hbm [thread:$0]  %s736, 768, %s5, [#allocation3], 128, 128, 8
    $region25: #{_irfft2_forward.1} parent=1 // pred_fallthru
      _
    // Predicated region
    $region26: #{_irfft2_forward.1} parent=1 // pred_check
      _
    $region27: #{_irfft2_forward.1} parent=1 // pred_check_branch
      %743 = sbr.rel (0) target = $region29
    $region28: #{_irfft2_forward.1} parent=1 // pred_region
      %744 = dma.done [#allocation3], 768
    $region29: #{_irfft2_forward.1} parent=1 // pred_fallthru
      _
    %745 = vsyncpa [#allocation3], 1

</llo_original>
